<compile_context>
chip_gen: v5e
topology: v5e:2x2
jax: 0.10.0
libtpu: 0.0.40
codegen_flags: <defaults>
</compile_context>

<pallas_src>
import jax
import jax.numpy as jnp
from jax.experimental import pallas as pl
from jax.experimental.pallas import tpu as pltpu


def _attention_kernel(x_ref, wt_ref, b_ref, o_ref):
    # x_ref: (TB, C, L); wt_ref: (C, C) = W^T (pre-transposed); b_ref: (1, C)
    x = x_ref[...]                                              # (TB, C, L) f32

    # AdaptiveMaxPool1d(1): max over the length dim.
    m = jnp.max(x, axis=-1)                                     # (TB, C)

    # Linear: y = m @ W^T + b  -- a single small MXU matmul for the whole tile.
    # TODO(synk): if v7x profiling ever shows this epilogue exposed, repack the
    # (TB, C) intermediates as (C, TB) so the softmax runs on dense lanes.
    y = jnp.dot(m, wt_ref[...],
                preferred_element_type=jnp.float32) + b_ref[...]  # (TB, C)

    # Softmax over the channel / feature dim (PyTorch Softmax(dim=1)).
    y = y - jnp.max(y, axis=-1, keepdims=True)
    e = jnp.exp(y)
    a = e / jnp.sum(e, axis=-1, keepdims=True)   # exact; off the critical path

    # Broadcast attention weights over L and add the residual.
    o_ref[...] = (a[:, :, None] + x).astype(o_ref.dtype)


def _num_tensorcores():
    """Best-effort TensorCores per chip (v5e/v6e: 1, v7x: 2). Never raises."""
    try:
        info = pltpu.get_tpu_info()
        for name in ("num_cores", "core_count", "num_tensorcores",
                     "num_cores_per_chip", "tensor_core_count"):
            v = getattr(info, name, None)
            if v:
                return max(1, int(v))
    except Exception:
        pass
    try:
        return max(1, int(getattr(jax.devices()[0], "num_cores", 1) or 1))
    except Exception:
        return 1


def _pick_batch_tile(B, C, L, itemsize, target_tile_bytes=8 << 20, num_cores=1):
    """Batch tile so each (TB, C, L) block is ~8 MiB (or all of B if smaller).

    8 MiB blocks -> 2 input + 2 output double buffers ~= 32 MiB, which fits
    the raised scoped-VMEM limit on every generation while amortizing the
    ~0.35 us per-grid-step overhead (important at v7x's 3.2 TB/s HBM).
    """
    per_batch = max(1, C * L * itemsize)
    tb = max(1, min(B, target_tile_bytes // per_batch))
    # Multi-TensorCore chips only (v7x): ensure >= num_cores grid steps so the
    # batch-parallel axis load-balances; never force a split on 1-TC v5e/v6e.
    if num_cores > 1 and B >= num_cores:
        tb = min(tb, pl.cdiv(B, num_cores))
    # Prefer the largest divisor of B that is <= tb and >= tb/2 so every grid
    # step owns a full block (unmasked stores); otherwise keep tb and let the
    # last grid step own a partial leading-dim block.  Either way there is no
    # wrapper-side pad / slice over x (no extra HBM passes).
    for cand in range(int(tb), 0, -1):
        if B % cand == 0:
            if 2 * cand >= tb:
                tb = cand
            break
    return int(max(1, tb))


def attention_forward(x, w, b):
    """Forward of the PyTorch `attention` module.

    x: (B, C, L) f32; w: (C, C) f32 in PyTorch (out_features, in_features)
    layout; b: (C,) f32.

    NOTE: the kernel writes its output in place over `x` (input_output_aliases),
    so the caller's `x` buffer is donated / overwritten.
    """
    B, C, L = x.shape
    orig_L = L

    # Keep the output store lane-dense (unmasked vst): pad L to a multiple of
    # 128 only when needed.  The pad value is very negative so the max-pool
    # over L ignores it; padded columns are sliced off at the end.
    pad_L = (-L) % 128
    if pad_L:
        x = jnp.pad(x, ((0, 0), (0, 0), (0, pad_L)),
                    constant_values=float(jnp.finfo(x.dtype).min))
        L += pad_L

    wt = w.T                        # hoist the transpose out of the kernel
    b2d = b.reshape(1, C)

    num_cores = _num_tensorcores()
    tb = _pick_batch_tile(B, C, L, x.dtype.itemsize, num_cores=num_cores)
    grid_b = pl.cdiv(B, tb)         # last block may be partial: no batch pad

    block_bytes = tb * C * L * x.dtype.itemsize
    # 2 in + 2 out double buffers + weight/bias + compiler scratch.  Keep the
    # limit >= 32 MiB (v5e scoped default is only 16 MiB) and <= 48 MiB
    # (v7x physical VMEM per TensorCore is 64 MiB).
    vmem_limit = int(min(48 << 20, max(32 << 20, 4 * block_bytes + (8 << 20))))

    out = pl.pallas_call(
        _attention_kernel,
        out_shape=jax.ShapeDtypeStruct((B, C, L), x.dtype),
        grid_spec=pltpu.PrefetchScalarGridSpec(
            num_scalar_prefetch=0,
            grid=(grid_b,),
            in_specs=[
                pl.BlockSpec((tb, C, L), lambda i: (i, 0, 0)),
                pl.BlockSpec((C, C), lambda i: (0, 0)),
                pl.BlockSpec((1, C), lambda i: (0, 0)),
            ],
            out_specs=pl.BlockSpec((tb, C, L), lambda i: (i, 0, 0)),
        ),
        # x is read then overwritten block-by-block -> alias it onto the output
        # (no second B*C*L HBM allocation).
        input_output_aliases={0: 0},
        compiler_params=pltpu.CompilerParams(
            dimension_semantics=("parallel",),
            vmem_limit_bytes=vmem_limit,
        ),
    )(x, wt, b2d)

    if pad_L:
        out = out[:, :, :orig_L]
    return out


def _reference(x, w, b):
    # Pure-JAX reference mirroring the PyTorch forward.
    m = jnp.max(x, axis=-1)                  # (B, C)
    y = m @ w.T + b                          # (B, C)
    a = jax.nn.softmax(y, axis=-1)           # softmax over the feature dim
    return a[:, :, None] + x


if __name__ == "__main__":
    B, C, L = 2, 8, 128   # feature_num = C = 8, sequence length L = 128
    key = jax.random.PRNGKey(0)
    kx, kw, kb = jax.random.split(key, 3)

    x = jax.random.normal(kx, (B, C, L), dtype=jnp.float32)
    # PyTorch-style Linear init: uniform(-1/sqrt(C), 1/sqrt(C))
    bound = 1.0 / jnp.sqrt(jnp.float32(C))
    w = jax.random.uniform(kw, (C, C), minval=-bound, maxval=bound,
                           dtype=jnp.float32)
    b = jax.random.uniform(kb, (C,), minval=-bound, maxval=bound,
                           dtype=jnp.float32)

    # Compute and materialize the reference BEFORE the output-aliased kernel
    # call overwrites x's buffer.
    ref = jax.block_until_ready(_reference(x, w, b))

    out = jax.block_until_ready(attention_forward(x, w, b))

    assert out.shape == (B, C, L)
    assert jnp.allclose(out, ref, atol=1e-5, rtol=1e-5), \
        float(jnp.max(jnp.abs(out - ref)))

    print("KERNEL_OK")
</pallas_src>

<mosaic_0001>
module attributes {stable_mosaic.version = 11 : i64} {
  func.func @_attention_kernel(%arg0: i32, %arg1: memref<2x8x128xf32, #tpu.memory_space<vmem>>, %arg2: memref<8x8xf32, #tpu.memory_space<vmem>>, %arg3: memref<1x8xf32, #tpu.memory_space<vmem>>, %arg4: memref<2x8x128xf32, #tpu.memory_space<vmem>>) attributes {dimension_semantics = [#tpu.dimension_semantics<parallel>], iteration_bounds = array<i64: 1>, scalar_prefetch = 0 : i64, scratch_operands = 0 : i64, tpu.core_type = #tpu.core_type<tc>, window_params = [{transform_indices = @transform_0, window_bounds = array<i64: 2, 8, 128>}, {pipeline_mode = #tpu.pipeline_mode<synchronous>, transform_indices = @transform_1, window_bounds = array<i64: 8, 8>}, {pipeline_mode = #tpu.pipeline_mode<synchronous>, transform_indices = @transform_2, window_bounds = array<i64: 1, 8>}, {transform_indices = @transform_3, window_bounds = array<i64: 2, 8, 128>}]} {
    %c0 = arith.constant 0 : index
    %c0_0 = arith.constant 0 : index
    %c0_1 = arith.constant 0 : index
    %0 = vector.load %arg1[%c0, %c0_0, %c0_1] : memref<2x8x128xf32, #tpu.memory_space<vmem>>, vector<2x8x128xf32>
    %cst = arith.constant dense<0xFF800000> : vector<2x8xf32>
    %1 = vector.multi_reduction <maximumf>, %0, %cst [2] : vector<2x8x128xf32> to vector<2x8xf32>
    %c0_2 = arith.constant 0 : index
    %c0_3 = arith.constant 0 : index
    %2 = vector.load %arg2[%c0_2, %c0_3] : memref<8x8xf32, #tpu.memory_space<vmem>>, vector<8x8xf32>
    %cst_4 = arith.constant dense<0.000000e+00> : vector<2x8xf32>
    %3 = tpu.matmul %1, %2, %cst_4 {dimension_numbers = #tpu.dot_dimension_numbers<[1], [0], [0], [1], [0, 0, 1, 1], [], []>} : vector<2x8xf32>, vector<8x8xf32>, vector<2x8xf32> -> vector<2x8xf32>
    %c0_5 = arith.constant 0 : index
    %c0_6 = arith.constant 0 : index
    %4 = vector.load %arg3[%c0_5, %c0_6] : memref<1x8xf32, #tpu.memory_space<vmem>>, vector<1x8xf32>
    %5 = vector.broadcast %4 : vector<1x8xf32> to vector<2x8xf32>
    %6 = arith.addf %3, %5 : vector<2x8xf32>
    %cst_7 = arith.constant dense<0xFF800000> : vector<2xf32>
    %7 = vector.multi_reduction <maximumf>, %6, %cst_7 [1] : vector<2x8xf32> to vector<2xf32>
    %8 = vector.shape_cast %7 : vector<2xf32> to vector<2x1xf32>
    %9 = vector.broadcast %8 : vector<2x1xf32> to vector<2x8xf32>
    %10 = arith.subf %6, %9 : vector<2x8xf32>
    %11 = math.exp %10 : vector<2x8xf32>
    %cst_8 = arith.constant dense<0.000000e+00> : vector<2xf32>
    %12 = vector.multi_reduction <add>, %11, %cst_8 [1] : vector<2x8xf32> to vector<2xf32>
    %13 = vector.shape_cast %12 : vector<2xf32> to vector<2x1xf32>
    %14 = vector.broadcast %13 : vector<2x1xf32> to vector<2x8xf32>
    %15 = arith.divf %11, %14 : vector<2x8xf32>
    %16 = vector.shape_cast %15 : vector<2x8xf32> to vector<2x8x1xf32>
    %17 = vector.broadcast %16 : vector<2x8x1xf32> to vector<2x8x128xf32>
    %18 = arith.addf %17, %0 : vector<2x8x128xf32>
    %c0_9 = arith.constant 0 : index
    %c0_10 = arith.constant 0 : index
    %c0_11 = arith.constant 0 : index
    %19 = vector.load %arg4[%c0_9, %c0_10, %c0_11] : memref<2x8x128xf32, #tpu.memory_space<vmem>>, vector<2x8x128xf32>
    tpu.vector_store %arg4[%c0_9, %c0_10, %c0_11], %18 {strides = array<i32>} : memref<2x8x128xf32, #tpu.memory_space<vmem>>, vector<2x8x128xf32>,
    return
  }
  func.func @transform_0(%arg0: i32) -> (i32, i32, i32) {
    %c0_i32 = arith.constant 0 : i32
    %c0_i32_0 = arith.constant 0 : i32
    %c0_i32_1 = arith.constant 0 : i32
    return %arg0, %c0_i32, %c0_i32_0 : i32, i32, i32
  }
  func.func @transform_1(%arg0: i32) -> (i32, i32) {
    %c0_i32 = arith.constant 0 : i32
    %c0_i32_0 = arith.constant 0 : i32
    %c0_i32_1 = arith.constant 0 : i32
    return %c0_i32, %c0_i32_0 : i32, i32
  }
  func.func @transform_2(%arg0: i32) -> (i32, i32) {
    %c0_i32 = arith.constant 0 : i32
    %c0_i32_0 = arith.constant 0 : i32
    %c0_i32_1 = arith.constant 0 : i32
    return %c0_i32, %c0_i32_0 : i32, i32
  }
  func.func @transform_3(%arg0: i32) -> (i32, i32, i32) {
    %c0_i32 = arith.constant 0 : i32
    %c0_i32_0 = arith.constant 0 : i32
    %c0_i32_1 = arith.constant 0 : i32
    return %arg0, %c0_i32, %c0_i32_0 : i32, i32, i32
  }
}

</mosaic_0001>

<llo_original>
// kernel: tpu_custom_call.1
$region0: #{tpu_custom_call.1}
  #allocation0 [shape = 'u32[]', space=smem, size = 0x4, offset = 0x4, fixed_abs, tag = 'smem constant byte address 0x4 - core index']
  #allocation1 [shape = 'u32[72,128]{1,0:T(1,128)}', space=vmem, size = 0x9000, scoped, tag = 'internal scratch']
  %s0 = inlined_call_operand.hbm [shape: f32[2,8,128], index: 0, kind: input, shape index: {}, may-alias: {0,3}]
  %s1 = inlined_call_operand.vmem [shape: f32[8,8], index: 1, kind: input, shape index: {}]
  %s2 = inlined_call_operand.vmem [shape: f32[1,8], index: 2, kind: input, shape index: {}]
  %s3 = inlined_call_operand.hbm [shape: f32[2,8,128], index: 3, kind: output, shape index: {}, may-alias: {0,3}]
  %s4 = sld [smem:[#allocation0]]
  $region26: #{tpu_custom_call.1} parent=0
    _
  %s6 = ssub.s32 1, %s4
  %s7 = scalar_select 0, %s6, %s4
  $region1: #{tpu_custom_call.1} parent=0
    #allocation2 [shape = 'u8[8192]{0}', space=vmem, size = 0x2000, scoped, tag = 'input window, operand 0, single buffered']
    #allocation3 [shape = 's32[1]{0}', space=sflag, size = 0x4, scoped, tag = 'scoped memory for tpu_custom_call.1']
    #allocation4 [shape = 's32[1]{0}', space=sflag, size = 0x4, scoped, tag = 'scoped memory for tpu_custom_call.1']
    #allocation5 [shape = 'u8[8192]{0}', space=vmem, size = 0x2000, scoped, tag = 'output window, operand 0, single buffered']
    %8 = vsyncpa [#allocation3], 0
    %9 = vsyncpa [#allocation4], 0
    // Predicated region
    $region2: #{tpu_custom_call.1} parent=1 // pred_check
      _
    $region3: #{tpu_custom_call.1} parent=1 // pred_check_branch
      %11 = sbr.rel (0) target = $region5
    $region4: #{tpu_custom_call.1} parent=1 // pred_region
      %13 = vsyncadd [#allocation3], 0
      %s14 = sshll.u32 %s0, 4
      %s15 = int_to_ptr.hbm [resolvable:$true] %s14
      %s16 = sshll.u32 [#allocation2], 4
      %s17 = int_to_ptr.vmem [resolvable:$true] %s16
      %22 = dma.hbm_to_vmem [thread:$0]  %s15, 256, %s17, [#allocation3], 128, 128, 8
    $region5: #{tpu_custom_call.1} parent=1 // pred_fallthru
      _
    // Predicated region
    $region6: #{tpu_custom_call.1} parent=1 // pred_check
      _
    $region7: #{tpu_custom_call.1} parent=1 // pred_check_branch
      %24 = sbr.rel (0) target = $region9
    $region8: #{tpu_custom_call.1} parent=1 // pred_region
      _
    $region9: #{tpu_custom_call.1} parent=1 // pred_fallthru
      _
    // Predicated region
    $region10: #{tpu_custom_call.1} parent=1 // pred_check
      _
    $region11: #{tpu_custom_call.1} parent=1 // pred_check_branch
      %26 = sbr.rel (0) target = $region13
    $region12: #{tpu_custom_call.1} parent=1 // pred_region
      _
    $region13: #{tpu_custom_call.1} parent=1 // pred_fallthru
      _
    // Predicated region
    $region14: #{tpu_custom_call.1} parent=1 // pred_check
      _
    $region15: #{tpu_custom_call.1} parent=1 // pred_check_branch
      %28 = sbr.rel (0) target = $region17
    $region16: #{tpu_custom_call.1} parent=1 // pred_region
      %30 = dma.done [#allocation3], 256
    $region17: #{tpu_custom_call.1} parent=1 // pred_fallthru
      _
    %v31 = vld [vmem:[#allocation2] sm:$0xff]
    %v32 = vld [vmem:[#allocation2 + $0x8] sm:$0xff]
    %33 = vmax.xlane.f32.xlu0 %v31
    %v34 = vpop.xlane.xlu0 %33
    %35 = vmax.xlane.f32.xlu0 %v32
    %v36 = vpop.xlane.xlu0 %35
    %v37 = vld [vmem:[%s1] sm:$0xff]
    %v38 = vld [vmem:[%s2] sm:$0x1]
    %v40 = vperm.slane %v38, 0
    %v44 = vlaneseq
    %v45 = vand.u32 %v44, 127
    %v46 = vperm.slane %v34, %v45
    %v47 = vperm.slane %v36, %v45
    %vm48 = vcmask 1041409
    %v49 = vsel %vm48, %v47, %v46
    %vm50 = vcmask 64512
    %v51 = vsel %vm50, %v49, 0
    %53 = vmatpush.msra.mxu0 0.0
    %54 = vmatpush.msra.mxu0 0.0
    %55 = vmatpush.msra.mxu0 0.0
    %56 = vmatpush.msra.mxu0 0.0
    %57 = vmatpush.msra.mxu0 0.0
    %58 = vmatpush.msra.mxu0 0.0
    %59 = vmatpush.msra.mxu0 0.0
    %60 = vmatpush.msra.mxu0 0.0
    %61 = vmatpush.msra.mxu0 0.0
    %62 = vmatpush.msra.mxu0 0.0
    %63 = vmatpush.msra.mxu0 0.0
    %64 = vmatpush.msra.mxu0 0.0
    %65 = vmatpush.msra.mxu0 0.0
    %66 = vmatpush.msra.mxu0 0.0
    %67 = vmatpush.msra.mxu0 0.0
    %68 = vmatpush.msra.mxu0 %v37
    %69 = vmatmul.f32.gmra.mxu0 %v51
    %v70 = vpop.f32.mrf.mxu0
    %v71 = vadd.f32 %v40, %v70
    %72 = vdwg.mxu0
    %vm73 = vcmask 58368
    %v74 = vsel %vm73, %v71, -inf
    %75 = vmax.xlane.f32.xlu0 %v74
    %v76 = vpop.xlane.xlu0 %75
    %v77 = vsub.f32 %v71, %v76
    %v78 = vmul.f32 %v77, 1.442695
    %v79 = vpow.pop %v78
    %v80 = vsel %vm73, %v79, 0.0
    %81 = vadd.xlane.f32.xlu0 %v80
    %v82 = vpop.xlane.xlu0 %81
    %v83 = vrcp.pop %v82
    %v84 = vmul.f32 %v82, %v83
    %v85 = vsub.f32 1.0, %v84
    %v86 = vmul.f32 %v83, %v85
    %v87 = vadd.f32 %v83, %v86
    %vm88 = vweird.f32 %v82
    %vm89 = vweird.f32 %v83
    %vm90 = vmor %vm88, %vm89
    %v91 = vsel %vm90, %v83, %v87
    %v92 = vand.u32 2147483647, %v82
    %vm93 = vcmp.eq.f32.partialorder %v92, 8.507059e+37
    %v94 = vand.u32 %v82, 2147483648
    %v95 = vor.u32 1.1754944e-38, %v94
    %v96 = vsel %vm93, %v95, %v91
    %v97 = vmul.f32 %v79, %v96
    %v98 = vperm.slane %v97, 0
    %v99 = vlaneseq
    %v100 = vshrl.u32 %v99, 7
    %102 = vset.pattern.permute.xlu0 %v100
    %103 = vperm.xlu0 %102, %v98
    %v104 = vpop.permute.xlu0 %103
    %v105 = vperm.slane %v97, 1
    %v106 = vlaneseq
    %v107 = vshrl.u32 %v106, 7
    %109 = vset.pattern.permute.xlu0 %v107
    %110 = vperm.xlu0 %109, %v105
    %v111 = vpop.permute.xlu0 %110
    %v112 = vadd.f32 %v104, %v31
    %v113 = vadd.f32 %v111, %v32
    %114 = vst [vmem:[#allocation5] sm:$0xff] %v112
    %115 = vst [vmem:[#allocation5 + $0x8] sm:$0xff] %v113
    // Predicated region
    $region18: #{tpu_custom_call.1} parent=1 // pred_check
      _
    $region19: #{tpu_custom_call.1} parent=1 // pred_check_branch
      %117 = sbr.rel (0) target = $region21
    $region20: #{tpu_custom_call.1} parent=1 // pred_region
      %119 = vsyncadd [#allocation4], 0
      %s120 = sshll.u32 [#allocation5], 4
      %s121 = int_to_ptr.vmem [resolvable:$true] %s120
      %s122 = sshll.u32 %s3, 4
      %s123 = int_to_ptr.hbm [resolvable:$true] %s122
      %128 = dma.vmem_to_hbm [thread:$0]  %s121, 256, %s123, [#allocation4], 128, 128, 8
    $region21: #{tpu_custom_call.1} parent=1 // pred_fallthru
      _
    // Predicated region
    $region22: #{tpu_custom_call.1} parent=1 // pred_check
      _
    $region23: #{tpu_custom_call.1} parent=1 // pred_check_branch
      %130 = sbr.rel (0) target = $region25
    $region24: #{tpu_custom_call.1} parent=1 // pred_region
      %132 = dma.done [#allocation4], 256
    $region25: #{tpu_custom_call.1} parent=1 // pred_fallthru
      _
    %133 = vsyncpa [#allocation3], 1
    %134 = vsyncpa [#allocation4], 1

</llo_original>
